<compile_context>
chip_gen: v7x
topology: tpu7x:2x2x1
jax: 0.10.0
libtpu: 0.0.40
codegen_flags: <defaults>
</compile_context>

<pallas_src>
import functools

import jax
import jax.numpy as jnp
from jax.experimental import pallas as pl
from jax.experimental.pallas import tpu as pltpu


def se_kernel(x_ref, w1_ref, w2_ref, o_ref, *, inv_hw):
    # x_ref : (TB, HW, C) block, input dtype (C on lanes, HW on sublanes)
    # w1_ref: (C, Cr)  == fc1.weight.T
    # w2_ref: (Cr, C)  == fc2.weight.T
    x = x_ref[...]                                                  # (TB, HW, C)

    # Squeeze: global average pool over the spatial (sublane) axis,
    # accumulated in f32 without materializing an f32 copy of the block.
    y = jnp.sum(x, axis=1, dtype=jnp.float32) * inv_hw              # (TB, C) f32

    # Excitation: batched across the TB rows of the block; tiny flops that
    # hide under the streaming DMA (no transposes needed in this layout).
    h = jnp.dot(y, w1_ref[...].astype(jnp.float32),
                preferred_element_type=jnp.float32)                 # (TB, Cr)
    h = jnp.maximum(h, 0.0)
    s = jnp.dot(h, w2_ref[...].astype(jnp.float32),
                preferred_element_type=jnp.float32)                 # (TB, C)
    s = jax.nn.sigmoid(s)

    # Scale: cast the gate DOWN to the input dtype and broadcast along
    # sublanes (spatial positions); the multiply runs in the input dtype.
    gate = s.astype(o_ref.dtype)                                    # (TB, C)
    o_ref[...] = x * gate[:, None, :]


def _choose_tb(B, HW, C, itemsize, budget_bytes):
    """Largest batch-tile whose double-buffered in+out blocks fit the budget,
    while keeping >=2 grid steps (for 2-TC sharding) when that still moves
    plenty of bytes per step."""
    def block_bytes(tb):            # in + out, each double-buffered
        return 4 * tb * HW * C * itemsize

    divisors = [d for d in range(1, B + 1) if B % d == 0]
    fitting = [d for d in divisors if block_bytes(d) <= budget_bytes]
    tb = max(fitting) if fitting else 1
    if tb == B and B > 1:
        half = max(d for d in divisors if d <= B // 2)
        # bytes actually streamed per step with the smaller tile (in + out)
        if 2 * half * HW * C * itemsize >= (4 << 20):
            tb = half
    return tb


def se_layer(x, w1_t, w2_t):
    """x: (B, C, H, W); w1_t: (C, C//r); w2_t: (C//r, C). Returns (B, C, H, W)."""
    B, C, H, W = x.shape
    HW = H * W
    Cr = w1_t.shape[1]
    inv_hw = 1.0 / float(HW)

    # Layout plumbing: put C on the lane axis.  (B, C, H, W) -> (B, HW, C)
    x_lane = jnp.transpose(x, (0, 2, 3, 1)).reshape(B, HW, C)

    # VMEM budgeting (v7x-safe): blocks <= ~40 MiB, explicit 64 MiB limit.
    vmem_limit = 64 * 1024 * 1024
    tb = _choose_tb(B, HW, C, x.dtype.itemsize, budget_bytes=40 * 1024 * 1024)
    grid = (B // tb,)

    kernel = functools.partial(se_kernel, inv_hw=inv_hw)

    out_lane = pl.pallas_call(
        kernel,
        out_shape=jax.ShapeDtypeStruct((B, HW, C), x.dtype),
        grid_spec=pltpu.PrefetchScalarGridSpec(
            num_scalar_prefetch=0,
            grid=grid,
            in_specs=[
                pl.BlockSpec((tb, HW, C), lambda b: (b, 0, 0)),
                pl.BlockSpec((C, Cr), lambda b: (0, 0)),
                pl.BlockSpec((Cr, C), lambda b: (0, 0)),
            ],
            out_specs=pl.BlockSpec((tb, HW, C), lambda b: (b, 0, 0)),
        ),
        compiler_params=pltpu.CompilerParams(
            dimension_semantics=("parallel",),
            vmem_limit_bytes=vmem_limit,
        ),
    )(x_lane, w1_t, w2_t)

    # Back to NCHW.
    return jnp.transpose(out_lane.reshape(B, H, W, C), (0, 3, 1, 2))


def reference(x, w1_t, w2_t):
    """Pure-JAX reference matching the PyTorch module."""
    y = jnp.mean(x, axis=(2, 3))                       # (B, C)
    h = jnp.maximum(y @ w1_t, 0.0)                     # (B, C//r)
    s = jax.nn.sigmoid(h @ w2_t)                       # (B, C)
    return x * s[:, :, None, None]


if __name__ == "__main__":
    B, C, H, W = 2, 64, 8, 8
    reduction = 16
    Cr = C // reduction

    key = jax.random.PRNGKey(0)
    kx, k1, k2 = jax.random.split(key, 3)

    x = jax.random.normal(kx, (B, C, H, W), dtype=jnp.float32)
    # nn.Linear weights are (out, in); store transposes for y @ W.T.
    fc1_w = jax.random.normal(k1, (Cr, C), dtype=jnp.float32) * 0.1   # Linear(C, C//r)
    fc2_w = jax.random.normal(k2, (C, Cr), dtype=jnp.float32) * 0.1   # Linear(C//r, C)
    w1_t = fc1_w.T    # (C, Cr)
    w2_t = fc2_w.T    # (Cr, C)

    out = se_layer(x, w1_t, w2_t)
    jax.block_until_ready(out)

    ref = reference(x, w1_t, w2_t)
    assert out.shape == (B, C, H, W)
    assert jnp.allclose(out, ref, atol=1e-5, rtol=1e-5)

    print("KERNEL_OK")
</pallas_src>

<mosaic_0001>
module attributes {stable_mosaic.version = 11 : i64} {
  func.func @se_kernel(%arg0: i32, %arg1: memref<2x64x64xf32, #tpu.memory_space<vmem>>, %arg2: memref<64x4xf32, #tpu.memory_space<vmem>>, %arg3: memref<4x64xf32, #tpu.memory_space<vmem>>, %arg4: memref<2x64x64xf32, #tpu.memory_space<vmem>>) attributes {dimension_semantics = [#tpu.dimension_semantics<parallel>], iteration_bounds = array<i64: 1>, scalar_prefetch = 0 : i64, scratch_operands = 0 : i64, tpu.core_type = #tpu.core_type<tc>, window_params = [{transform_indices = @transform_0, window_bounds = array<i64: 2, 64, 64>}, {pipeline_mode = #tpu.pipeline_mode<synchronous>, transform_indices = @transform_1, window_bounds = array<i64: 64, 4>}, {pipeline_mode = #tpu.pipeline_mode<synchronous>, transform_indices = @transform_2, window_bounds = array<i64: 4, 64>}, {transform_indices = @transform_3, window_bounds = array<i64: 2, 64, 64>}]} {
    %c0 = arith.constant 0 : index
    %c0_0 = arith.constant 0 : index
    %c0_1 = arith.constant 0 : index
    %0 = vector.load %arg1[%c0, %c0_0, %c0_1] : memref<2x64x64xf32, #tpu.memory_space<vmem>>, vector<2x64x64xf32>
    %cst = arith.constant dense<0.000000e+00> : vector<2x64xf32>
    %1 = vector.multi_reduction <add>, %0, %cst [1] : vector<2x64x64xf32> to vector<2x64xf32>
    %cst_2 = arith.constant 1.562500e-02 : f32
    %2 = vector.broadcast %cst_2 : f32 to vector<2x64xf32>
    %3 = arith.mulf %1, %2 : vector<2x64xf32>
    %c0_3 = arith.constant 0 : index
    %c0_4 = arith.constant 0 : index
    %4 = vector.load %arg2[%c0_3, %c0_4] : memref<64x4xf32, #tpu.memory_space<vmem>>, vector<64x4xf32>
    %cst_5 = arith.constant dense<0.000000e+00> : vector<2x4xf32>
    %5 = tpu.matmul %3, %4, %cst_5 {dimension_numbers = #tpu.dot_dimension_numbers<[1], [0], [0], [1], [0, 0, 1, 1], [], []>} : vector<2x64xf32>, vector<64x4xf32>, vector<2x4xf32> -> vector<2x4xf32>
    %cst_6 = arith.constant 0.000000e+00 : f32
    %6 = vector.broadcast %cst_6 : f32 to vector<2x4xf32>
    %7 = arith.maximumf %5, %6 : vector<2x4xf32>
    %c0_7 = arith.constant 0 : index
    %c0_8 = arith.constant 0 : index
    %8 = vector.load %arg3[%c0_7, %c0_8] : memref<4x64xf32, #tpu.memory_space<vmem>>, vector<4x64xf32>
    %cst_9 = arith.constant dense<0.000000e+00> : vector<2x64xf32>
    %9 = tpu.matmul %7, %8, %cst_9 {dimension_numbers = #tpu.dot_dimension_numbers<[1], [0], [0], [1], [0, 0, 1, 1], [], []>} : vector<2x4xf32>, vector<4x64xf32>, vector<2x64xf32> -> vector<2x64xf32>
    %10 = arith.negf %9 : vector<2x64xf32>
    %11 = math.exp %10 : vector<2x64xf32>
    %cst_10 = arith.constant 1.000000e+00 : f32
    %12 = vector.broadcast %cst_10 : f32 to vector<2x64xf32>
    %13 = arith.addf %12, %11 : vector<2x64xf32>
    %14 = arith.divf %12, %13 : vector<2x64xf32>
    %15 = vector.shape_cast %14 : vector<2x64xf32> to vector<2x1x64xf32>
    %16 = vector.broadcast %15 : vector<2x1x64xf32> to vector<2x64x64xf32>
    %17 = arith.mulf %0, %16 : vector<2x64x64xf32>
    %c0_11 = arith.constant 0 : index
    %c0_12 = arith.constant 0 : index
    %c0_13 = arith.constant 0 : index
    %18 = vector.load %arg4[%c0_11, %c0_12, %c0_13] : memref<2x64x64xf32, #tpu.memory_space<vmem>>, vector<2x64x64xf32>
    tpu.vector_store %arg4[%c0_11, %c0_12, %c0_13], %17 {strides = array<i32>} : memref<2x64x64xf32, #tpu.memory_space<vmem>>, vector<2x64x64xf32>,
    return
  }
  func.func @transform_0(%arg0: i32) -> (i32, i32, i32) {
    %c0_i32 = arith.constant 0 : i32
    %c0_i32_0 = arith.constant 0 : i32
    %c0_i32_1 = arith.constant 0 : i32
    return %arg0, %c0_i32, %c0_i32_0 : i32, i32, i32
  }
  func.func @transform_1(%arg0: i32) -> (i32, i32) {
    %c0_i32 = arith.constant 0 : i32
    %c0_i32_0 = arith.constant 0 : i32
    %c0_i32_1 = arith.constant 0 : i32
    return %c0_i32, %c0_i32_0 : i32, i32
  }
  func.func @transform_2(%arg0: i32) -> (i32, i32) {
    %c0_i32 = arith.constant 0 : i32
    %c0_i32_0 = arith.constant 0 : i32
    %c0_i32_1 = arith.constant 0 : i32
    return %c0_i32, %c0_i32_0 : i32, i32
  }
  func.func @transform_3(%arg0: i32) -> (i32, i32, i32) {
    %c0_i32 = arith.constant 0 : i32
    %c0_i32_0 = arith.constant 0 : i32
    %c0_i32_1 = arith.constant 0 : i32
    return %arg0, %c0_i32, %c0_i32_0 : i32, i32, i32
  }
}

</mosaic_0001>

<llo_original>
// kernel: tpu_custom_call.1
$region0: #{tpu_custom_call.1}
  #allocation0 [shape = 'u32[]', space=smem, size = 0x4, offset = 0x4, fixed_abs, tag = 'smem constant byte address 0x4 - core index']
  #allocation1 [shape = 'u32[144,128]{1,0:T(1,128)}', space=vmem, size = 0x12000, scoped, tag = 'internal scratch']
  %s0 = inlined_call_operand.hbm [shape: f32[2,64,64], index: 0, kind: input, shape index: {}]
  %s1 = inlined_call_operand.hbm [shape: f32[64,4], index: 1, kind: input, shape index: {}]
  %s2 = inlined_call_operand.hbm [shape: f32[4,64], index: 2, kind: input, shape index: {}]
  %s3 = inlined_call_operand.hbm [shape: f32[2,64,64], index: 3, kind: output, shape index: {}]
  %s4 = sld [smem:[#allocation0]]
  $region34: #{tpu_custom_call.1} parent=0
    _
  %s6 = ssub.s32 1, %s4
  %s7 = scalar_select 0, %s6, %s4
  $region1: #{tpu_custom_call.1} parent=0
    #allocation2 [shape = 'u8[65536]{0}', space=vmem, size = 0x10000, scoped, tag = 'input window, operand 0, single buffered']
    #allocation3 [shape = 's32[1]{0}', space=sflag, size = 0x4, scoped, tag = 'scoped memory for tpu_custom_call.1']
    #allocation4 [shape = 's32[1]{0}', space=sflag, size = 0x4, scoped, tag = 'scoped memory for tpu_custom_call.1']
    #allocation5 [shape = 'u8[32768]{0}', space=vmem, size = 0x8000, scoped, tag = 'input window, operand 1, single buffered']
    #allocation6 [shape = 's32[1]{0}', space=sflag, size = 0x4, scoped, tag = 'scoped memory for tpu_custom_call.1']
    #allocation7 [shape = 'u8[2048]{0}', space=vmem, size = 0x800, scoped, tag = 'input window, operand 2, single buffered']
    #allocation8 [shape = 'u8[65536]{0}', space=vmem, size = 0x10000, scoped, tag = 'output window, operand 0, single buffered']
    %8 = vsyncpa [#allocation3], 0
    %9 = vsyncpa [#allocation6], 0
    %10 = vsyncpa [#allocation4], 0
    // Predicated region
    $region2: #{tpu_custom_call.1} parent=1 // pred_check
      _
    $region3: #{tpu_custom_call.1} parent=1 // pred_check_branch
      %12 = sbr.rel (0) target = $region5
    $region4: #{tpu_custom_call.1} parent=1 // pred_region
      %s14 = ssub.s32 2048, 2048
      %15 = vsyncadd [#allocation3], %s14
      %s16 = sshll.u32 [#allocation2], 4
      %s17 = int_to_ptr.vmem [resolvable:$true] %s16
      %22 = dma.hbm_to_vmem [thread:$0]  %s0, 2048, %s17, [#allocation3], 128, 128, 8
    $region5: #{tpu_custom_call.1} parent=1 // pred_fallthru
      _
    // Predicated region
    $region6: #{tpu_custom_call.1} parent=1 // pred_check
      _
    $region7: #{tpu_custom_call.1} parent=1 // pred_check_branch
      %24 = sbr.rel (0) target = $region9
    $region8: #{tpu_custom_call.1} parent=1 // pred_region
      %s26 = ssub.s32 1024, 1024
      %27 = vsyncadd [#allocation6], %s26
      %s28 = sshll.u32 [#allocation5], 4
      %s29 = int_to_ptr.vmem [resolvable:$true] %s28
      %34 = dma.hbm_to_vmem [thread:$0]  %s1, 1024, %s29, [#allocation6], 128, 128, 8
    $region9: #{tpu_custom_call.1} parent=1 // pred_fallthru
      _
    // Predicated region
    $region10: #{tpu_custom_call.1} parent=1 // pred_check
      _
    $region11: #{tpu_custom_call.1} parent=1 // pred_check_branch
      %36 = sbr.rel (0) target = $region13
    $region12: #{tpu_custom_call.1} parent=1 // pred_region
      %s38 = ssub.s32 64, 64
      %39 = vsyncadd [#allocation6], %s38
      %s41 = sshll.u32 [#allocation7], 4
      %s42 = int_to_ptr.vmem [resolvable:$true] %s41
      %44 = dma.hbm_to_vmem [thread:$0]  %s2, 64, %s42, [#allocation6]
    $region13: #{tpu_custom_call.1} parent=1 // pred_fallthru
      _
    // Predicated region
    $region14: #{tpu_custom_call.1} parent=1 // pred_check
      _
    $region15: #{tpu_custom_call.1} parent=1 // pred_check_branch
      %46 = sbr.rel (0) target = $region17
    $region16: #{tpu_custom_call.1} parent=1 // pred_region
      %47 = dma.done [#allocation3], 2048
    $region17: #{tpu_custom_call.1} parent=1 // pred_fallthru
      _
    // Predicated region
    $region18: #{tpu_custom_call.1} parent=1 // pred_check
      _
    $region19: #{tpu_custom_call.1} parent=1 // pred_check_branch
      %49 = sbr.rel (0) target = $region21
    $region20: #{tpu_custom_call.1} parent=1 // pred_region
      %50 = dma.done [#allocation6], 1024
    $region21: #{tpu_custom_call.1} parent=1 // pred_fallthru
      _
    // Predicated region
    $region22: #{tpu_custom_call.1} parent=1 // pred_check
      _
    $region23: #{tpu_custom_call.1} parent=1 // pred_check_branch
      %52 = sbr.rel (0) target = $region25
    $region24: #{tpu_custom_call.1} parent=1 // pred_region
      %53 = dma.done [#allocation6], 64
    $region25: #{tpu_custom_call.1} parent=1 // pred_fallthru
      _
    %v54 = vld [vmem:[#allocation2] sm:$0xff]
    %v55 = vld [vmem:[#allocation2 + $0x8] sm:$0xff]
    %v56 = vld [vmem:[#allocation2 + $0x10] sm:$0xff]
    %v57 = vld [vmem:[#allocation2 + $0x18] sm:$0xff]
    %v58 = vld [vmem:[#allocation2 + $0x20] sm:$0xff]
    %v59 = vld [vmem:[#allocation2 + $0x28] sm:$0xff]
    %v60 = vld [vmem:[#allocation2 + $0x30] sm:$0xff]
    %v61 = vld [vmem:[#allocation2 + $0x38] sm:$0xff]
    %v62 = vld [vmem:[#allocation2 + $0x40] sm:$0xff]
    %v63 = vld [vmem:[#allocation2 + $0x48] sm:$0xff]
    %v64 = vld [vmem:[#allocation2 + $0x50] sm:$0xff]
    %v65 = vld [vmem:[#allocation2 + $0x58] sm:$0xff]
    %v66 = vld [vmem:[#allocation2 + $0x60] sm:$0xff]
    %v67 = vld [vmem:[#allocation2 + $0x68] sm:$0xff]
    %v68 = vld [vmem:[#allocation2 + $0x70] sm:$0xff]
    %v69 = vld [vmem:[#allocation2 + $0x78] sm:$0xff]
    %vm70 = vcmask 523264
    %v71 = vsel %vm70, %v54, 0.0
    %v72 = vsel %vm70, %v55, 0.0
    %v73 = vadd.f32 %v71, %v72
    %v74 = vsel %vm70, %v56, 0.0
    %v75 = vadd.f32 %v73, %v74
    %v76 = vsel %vm70, %v57, 0.0
    %v77 = vadd.f32 %v75, %v76
    %v78 = vsel %vm70, %v58, 0.0
    %v79 = vadd.f32 %v77, %v78
    %v80 = vsel %vm70, %v59, 0.0
    %v81 = vadd.f32 %v79, %v80
    %v82 = vsel %vm70, %v60, 0.0
    %v83 = vadd.f32 %v81, %v82
    %v84 = vsel %vm70, %v61, 0.0
    %v85 = vadd.f32 %v83, %v84
    %v86 = vrot.slane %v85, 4
    %v87 = vadd.f32 %v85, %v86
    %v88 = vrot.slane %v87, 2
    %v89 = vadd.f32 %v87, %v88
    %v90 = vrot.slane %v89, 1
    %v91 = vadd.f32 %v89, %v90
    %v92 = vsel %vm70, %v62, 0.0
    %v93 = vsel %vm70, %v63, 0.0
    %v94 = vadd.f32 %v92, %v93
    %v95 = vsel %vm70, %v64, 0.0
    %v96 = vadd.f32 %v94, %v95
    %v97 = vsel %vm70, %v65, 0.0
    %v98 = vadd.f32 %v96, %v97
    %v99 = vsel %vm70, %v66, 0.0
    %v100 = vadd.f32 %v98, %v99
    %v101 = vsel %vm70, %v67, 0.0
    %v102 = vadd.f32 %v100, %v101
    %v103 = vsel %vm70, %v68, 0.0
    %v104 = vadd.f32 %v102, %v103
    %v105 = vsel %vm70, %v69, 0.0
    %v106 = vadd.f32 %v104, %v105
    %v107 = vrot.slane %v106, 4
    %v108 = vadd.f32 %v106, %v107
    %v109 = vrot.slane %v108, 2
    %v110 = vadd.f32 %v108, %v109
    %v111 = vrot.slane %v110, 1
    %v112 = vadd.f32 %v110, %v111
    %v113 = vmul.f32 %v91, 0.015625
    %v114 = vmul.f32 %v112, 0.015625
    %v115 = vld [vmem:[#allocation5] sm:$0xff]
    %v116 = vld [vmem:[#allocation5 + $0x8] sm:$0xff]
    %v117 = vld [vmem:[#allocation5 + $0x10] sm:$0xff]
    %v118 = vld [vmem:[#allocation5 + $0x18] sm:$0xff]
    %v119 = vld [vmem:[#allocation5 + $0x20] sm:$0xff]
    %v120 = vld [vmem:[#allocation5 + $0x28] sm:$0xff]
    %v121 = vld [vmem:[#allocation5 + $0x30] sm:$0xff]
    %v122 = vld [vmem:[#allocation5 + $0x38] sm:$0xff]
    %vm125 = vcmask 1041409
    %v126 = vsel %vm125, %v114, %v113
    %v127 = vsel %vm70, %v126, 0
    %129 = vmatprep.subr.mxu0 0.0
    %130 = vmatpush1.msra.mxu0 %v115
    %131 = vmatprep.subr.mxu0 0.0
    %132 = vmatpush1.msra.mxu0 %v116
    %133 = vmatprep.subr.mxu0 0.0
    %134 = vmatpush1.msra.mxu0 %v117
    %135 = vmatprep.subr.mxu0 0.0
    %136 = vmatpush1.msra.mxu0 %v118
    %137 = vmatprep.subr.mxu0 0.0
    %138 = vmatpush1.msra.mxu0 %v119
    %139 = vmatprep.subr.mxu0 0.0
    %140 = vmatpush1.msra.mxu0 %v120
    %141 = vmatprep.subr.mxu0 0.0
    %142 = vmatpush1.msra.mxu0 %v121
    %143 = vmatprep.subr.mxu0 0.0
    %144 = vmatpush1.msra.mxu0 %v122
    %145 = vmatprep.subr.mxu0 0.0
    %146 = vmatpush1.msra.mxu0 0.0
    %147 = vmatprep.subr.mxu0 0.0
    %148 = vmatpush1.msra.mxu0 0.0
    %149 = vmatprep.subr.mxu0 0.0
    %150 = vmatpush1.msra.mxu0 0.0
    %151 = vmatprep.subr.mxu0 0.0
    %152 = vmatpush1.msra.mxu0 0.0
    %153 = vmatprep.subr.mxu0 0.0
    %154 = vmatpush1.msra.mxu0 0.0
    %155 = vmatprep.subr.mxu0 0.0
    %156 = vmatpush1.msra.mxu0 0.0
    %157 = vmatprep.subr.mxu0 0.0
    %158 = vmatpush1.msra.mxu0 0.0
    %159 = vmatprep.subr.mxu0 0.0
    %160 = vmatpush1.msra.mxu0 0.0
    %161 = vmatprep.subr.mxu0 0.0
    %162 = vmatpush1.msra.mxu0 0.0
    %163 = vmatprep.subr.mxu0 0.0
    %164 = vmatpush1.msra.mxu0 0.0
    %165 = vmatprep.subr.mxu0 0.0
    %166 = vmatpush1.msra.mxu0 0.0
    %167 = vmatprep.subr.mxu0 0.0
    %168 = vmatpush1.msra.mxu0 0.0
    %169 = vmatprep.subr.mxu0 0.0
    %170 = vmatpush1.msra.mxu0 0.0
    %171 = vmatprep.subr.mxu0 0.0
    %172 = vmatpush1.msra.mxu0 0.0
    %173 = vmatprep.subr.mxu0 0.0
    %174 = vmatpush1.msra.mxu0 0.0
    %175 = vmatprep.subr.mxu0 0.0
    %176 = vmatpush1.msra.mxu0 0.0
    %177 = vmatprep.subr.mxu0 0.0
    %178 = vmatpush1.msra.mxu0 0.0
    %179 = vmatprep.subr.mxu0 0.0
    %180 = vmatpush1.msra.mxu0 0.0
    %181 = vmatprep.subr.mxu0 0.0
    %182 = vmatpush1.msra.mxu0 0.0
    %183 = vmatprep.subr.mxu0 0.0
    %184 = vmatpush1.msra.mxu0 0.0
    %185 = vmatprep.subr.mxu0 0.0
    %186 = vmatpush1.msra.mxu0 0.0
    %187 = vmatprep.subr.mxu0 0.0
    %188 = vmatpush1.msra.mxu0 0.0
    %189 = vmatprep.subr.mxu0 0.0
    %190 = vmatpush1.msra.mxu0 0.0
    %191 = vmatprep.subr.mxu0 0.0
    %192 = vmatpush1.msra.mxu0 0.0
    %193 = vmatprep.mubr.f32.mxu0 0.0
    %194 = vmatmul.mubr.f32.gmra.mrb[0].mxu0 %v127
    %v195 = vpop.f32.mrb[0].mxu0
    %v196 = vadd.f32 0.0, %v195
    %v197 = vpop.f32.mrb[0].mxu0
    %198 = vdwg.mxu0
    %v199 = vmax.f32 %v196, 0.0
    %v200 = vld [vmem:[#allocation7] sm:$0xf]
    %vm201 = vcmask 31744
    %v203 = vsel %vm201, %v199, 0
    %vm205 = vcmask 1043456
    %v207 = vsel %vm205, %v200, 0
    %209 = vmatprep.subr.mxu0 0.0
    %210 = vmatpush1.msra.mxu0 %v207
    %211 = vmatprep.subr.mxu0 0.0
    %212 = vmatpush1.msra.mxu0 0.0
    %213 = vmatprep.subr.mxu0 0.0
    %214 = vmatpush1.msra.mxu0 0.0
    %215 = vmatprep.subr.mxu0 0.0
    %216 = vmatpush1.msra.mxu0 0.0
    %217 = vmatprep.subr.mxu0 0.0
    %218 = vmatpush1.msra.mxu0 0.0
    %219 = vmatprep.subr.mxu0 0.0
    %220 = vmatpush1.msra.mxu0 0.0
    %221 = vmatprep.subr.mxu0 0.0
    %222 = vmatpush1.msra.mxu0 0.0
    %223 = vmatprep.subr.mxu0 0.0
    %224 = vmatpush1.msra.mxu0 0.0
    %225 = vmatprep.subr.mxu0 0.0
    %226 = vmatpush1.msra.mxu0 0.0
    %227 = vmatprep.subr.mxu0 0.0
    %228 = vmatpush1.msra.mxu0 0.0
    %229 = vmatprep.subr.mxu0 0.0
    %230 = vmatpush1.msra.mxu0 0.0
    %231 = vmatprep.subr.mxu0 0.0
    %232 = vmatpush1.msra.mxu0 0.0
    %233 = vmatprep.subr.mxu0 0.0
    %234 = vmatpush1.msra.mxu0 0.0
    %235 = vmatprep.subr.mxu0 0.0
    %236 = vmatpush1.msra.mxu0 0.0
    %237 = vmatprep.subr.mxu0 0.0
    %238 = vmatpush1.msra.mxu0 0.0
    %239 = vmatprep.subr.mxu0 0.0
    %240 = vmatpush1.msra.mxu0 0.0
    %241 = vmatprep.subr.mxu0 0.0
    %242 = vmatpush1.msra.mxu0 0.0
    %243 = vmatprep.subr.mxu0 0.0
    %244 = vmatpush1.msra.mxu0 0.0
    %245 = vmatprep.subr.mxu0 0.0
    %246 = vmatpush1.msra.mxu0 0.0
    %247 = vmatprep.subr.mxu0 0.0
    %248 = vmatpush1.msra.mxu0 0.0
    %249 = vmatprep.subr.mxu0 0.0
    %250 = vmatpush1.msra.mxu0 0.0
    %251 = vmatprep.subr.mxu0 0.0
    %252 = vmatpush1.msra.mxu0 0.0
    %253 = vmatprep.subr.mxu0 0.0
    %254 = vmatpush1.msra.mxu0 0.0
    %255 = vmatprep.subr.mxu0 0.0
    %256 = vmatpush1.msra.mxu0 0.0
    %257 = vmatprep.subr.mxu0 0.0
    %258 = vmatpush1.msra.mxu0 0.0
    %259 = vmatprep.subr.mxu0 0.0
    %260 = vmatpush1.msra.mxu0 0.0
    %261 = vmatprep.subr.mxu0 0.0
    %262 = vmatpush1.msra.mxu0 0.0
    %263 = vmatprep.subr.mxu0 0.0
    %264 = vmatpush1.msra.mxu0 0.0
    %265 = vmatprep.subr.mxu0 0.0
    %266 = vmatpush1.msra.mxu0 0.0
    %267 = vmatprep.subr.mxu0 0.0
    %268 = vmatpush1.msra.mxu0 0.0
    %269 = vmatprep.subr.mxu0 0.0
    %270 = vmatpush1.msra.mxu0 0.0
    %271 = vmatprep.subr.mxu0 0.0
    %272 = vmatpush1.msra.mxu0 0.0
    %273 = vmatprep.mubr.f32.mxu0 0.0
    %274 = vmatmul.mubr.f32.gmra.mrb[0].mxu0 %v203
    %v275 = vpop.f32.mrb[0].mxu0
    %v276 = vadd.f32 0.0, %v275
    %v277 = vpop.f32.mrb[0].mxu0
    %278 = vdwg.mxu0
    %v279 = vxor.u32 %v276, 2147483648
    %v280 = vmul.f32 %v279, 1.442695
    %v281 = vpow.pop %v280
    %v282 = vadd.f32 %v281, 1.0
    %v283 = vrcp.pop %v282
    %v284 = vmul.f32 1.0, %v283
    %v287 = vunpack.c.l.s4 1966171168
    %v288 = vunpack.c.0.s8 %v287
    %v289 = vlaneseq
    %v290 = vshrl.u32 %v289, 7
    %v291 = vsub.s32 %v288, %v290
    %v292 = vrot.slane %v284, %v291
    %v293 = vcombine.high %v292, %v292
    %v295 = vunpack.c.l.s4 1966171168
    %v296 = vunpack.c.0.s8 %v295
    %v297 = vlaneseq
    %v298 = vshrl.u32 %v297, 7
    %v299 = vsub.s32 %v296, %v298
    %v300 = vrot.slane %v292, %v299
    %v302 = vunpack.c.l.s4 1966171168
    %v303 = vunpack.c.0.s8 %v302
    %v304 = vlaneseq
    %v305 = vshrl.u32 %v304, 7
    %v306 = vsub.s32 %v303, %v305
    %v307 = vrot.slane %v293, %v306
    %v308 = vlaneseq
    %v309 = vshrl.u32 %v308, 7
    %v310 = vsub.s32 0, %v309
    %v311 = vrot.slane %v300, %v310
    %v312 = vlaneseq
    %v313 = vshrl.u32 %v312, 7
    %v314 = vsub.s32 0, %v313
    %v315 = vrot.slane %v307, %v314
    %v318 = vmul.f32 %v54, %v311
    %v319 = vmul.f32 %v55, %v311
    %v320 = vmul.f32 %v56, %v311
    %v321 = vmul.f32 %v57, %v311
    %v322 = vmul.f32 %v58, %v311
    %v323 = vmul.f32 %v59, %v311
    %v324 = vmul.f32 %v60, %v311
    %v325 = vmul.f32 %v61, %v311
    %v326 = vmul.f32 %v62, %v315
    %v327 = vmul.f32 %v63, %v315
    %v328 = vmul.f32 %v64, %v315
    %v329 = vmul.f32 %v65, %v315
    %v330 = vmul.f32 %v66, %v315
    %v331 = vmul.f32 %v67, %v315
    %v332 = vmul.f32 %v68, %v315
    %v333 = vmul.f32 %v69, %v315
    %334 = vst.msk [vmem:[#allocation8] sm:$0xff] %vm70, %v318
    %335 = vst.msk [vmem:[#allocation8 + $0x8] sm:$0xff] %vm70, %v319
    %336 = vst.msk [vmem:[#allocation8 + $0x10] sm:$0xff] %vm70, %v320
    %337 = vst.msk [vmem:[#allocation8 + $0x18] sm:$0xff] %vm70, %v321
    %338 = vst.msk [vmem:[#allocation8 + $0x20] sm:$0xff] %vm70, %v322
    %339 = vst.msk [vmem:[#allocation8 + $0x28] sm:$0xff] %vm70, %v323
    %340 = vst.msk [vmem:[#allocation8 + $0x30] sm:$0xff] %vm70, %v324
    %341 = vst.msk [vmem:[#allocation8 + $0x38] sm:$0xff] %vm70, %v325
    %342 = vst.msk [vmem:[#allocation8 + $0x40] sm:$0xff] %vm70, %v326
    %343 = vst.msk [vmem:[#allocation8 + $0x48] sm:$0xff] %vm70, %v327
    %344 = vst.msk [vmem:[#allocation8 + $0x50] sm:$0xff] %vm70, %v328
    %345 = vst.msk [vmem:[#allocation8 + $0x58] sm:$0xff] %vm70, %v329
    %346 = vst.msk [vmem:[#allocation8 + $0x60] sm:$0xff] %vm70, %v330
    %347 = vst.msk [vmem:[#allocation8 + $0x68] sm:$0xff] %vm70, %v331
    %348 = vst.msk [vmem:[#allocation8 + $0x70] sm:$0xff] %vm70, %v332
    %349 = vst.msk [vmem:[#allocation8 + $0x78] sm:$0xff] %vm70, %v333
    // Predicated region
    $region26: #{tpu_custom_call.1} parent=1 // pred_check
      _
    $region27: #{tpu_custom_call.1} parent=1 // pred_check_branch
      %351 = sbr.rel (0) target = $region29
    $region28: #{tpu_custom_call.1} parent=1 // pred_region
      %s353 = ssub.s32 2048, 2048
      %354 = vsyncadd [#allocation4], %s353
      %s355 = sshll.u32 [#allocation8], 4
      %s356 = int_to_ptr.vmem [resolvable:$true] %s355
      %361 = dma.vmem_to_hbm [thread:$0]  %s356, 2048, %s3, [#allocation4], 128, 128, 8
    $region29: #{tpu_custom_call.1} parent=1 // pred_fallthru
      _
    // Predicated region
    $region30: #{tpu_custom_call.1} parent=1 // pred_check
      _
    $region31: #{tpu_custom_call.1} parent=1 // pred_check_branch
      %363 = sbr.rel (0) target = $region33
    $region32: #{tpu_custom_call.1} parent=1 // pred_region
      %364 = dma.done [#allocation4], 2048
    $region33: #{tpu_custom_call.1} parent=1 // pred_fallthru
      _
    %365 = vsyncpa [#allocation3], 1
    %366 = vsyncpa [#allocation6], 1
    %367 = vsyncpa [#allocation4], 1

</llo_original>
